<compile_context>
chip_gen: v5e
topology: v5e:2x2
jax: 0.10.0
libtpu: 0.0.40
codegen_flags: <defaults>
</compile_context>

<pallas_src>
import functools

import jax
import jax.numpy as jnp
from jax.experimental import pallas as pl
from jax.experimental.pallas import tpu as pltpu

# SH constants (identical to the PyTorch module)
C0 = 0.28209479177387814
C1 = 0.4886025119029199
C2 = [1.0925484305920792, -1.0925484305920792, 0.31539156525252005,
      -1.0925484305920792, 0.5462742152960396]
C3 = [-0.5900435899266435, 2.890611442640554, -0.4570457994644658,
      0.3731763325901154, -0.4570457994644658, 1.445305721320277,
      -0.5900435899266435]
C4 = [2.5033429417967046, -1.7701307697799304, 0.9461746957575601,
      -0.6690465435572892, 0.10578554691520431, -0.6690465435572892,
      0.47308734787878004, -1.7701307697799304, 0.6258357354491761]

LANE = 128  # TPU lane width


def _emit_sh_rows(x, y, z, degree, store):
    """Emits each SH basis row via store(row_index, value). Values match PyTorch."""
    store(0, jnp.full_like(x, C0))
    if degree > 1:
        store(1, -C1 * y)
        store(2, C1 * z)
        store(3, -C1 * x)
        if degree > 2:
            xx, yy, zz = x * x, y * y, z * z
            xy, yz, xz = x * y, y * z, x * z
            store(4, C2[0] * xy)
            store(5, C2[1] * yz)
            store(6, C2[2] * (2.0 * zz - xx - yy))
            store(7, C2[3] * xz)
            store(8, C2[4] * (xx - yy))
            if degree > 3:
                store(9, C3[0] * y * (3.0 * xx - yy))
                store(10, C3[1] * xy * z)
                store(11, C3[2] * y * (4.0 * zz - xx - yy))
                store(12, C3[3] * z * (2.0 * zz - 3.0 * xx - 3.0 * yy))
                store(13, C3[4] * x * (4.0 * zz - xx - yy))
                store(14, C3[5] * z * (xx - yy))
                store(15, C3[6] * x * (xx - 3.0 * yy))
                if degree > 4:
                    store(16, C4[0] * xy * (xx - yy))
                    store(17, C4[1] * yz * (3.0 * xx - yy))
                    store(18, C4[2] * xy * (7.0 * zz - 1.0))
                    store(19, C4[3] * yz * (7.0 * zz - 3.0))
                    store(20, C4[4] * (zz * (35.0 * zz - 30.0) + 3.0))
                    store(21, C4[5] * xz * (7.0 * zz - 3.0))
                    store(22, C4[6] * (xx - yy) * (7.0 * zz - 1.0))
                    store(23, C4[7] * xz * (xx - 3.0 * yy))
                    store(24, C4[8] * (xx * (xx - 3.0 * yy) - yy * (3.0 * xx - yy)))


def _make_sh_kernel(degree):
    def kernel(in_ref, out_ref):
        # in_ref:  (3, rows, 128)        -> x/y/z are full (rows, 128) vreg blocks
        # out_ref: (out_dim, rows, 128)  -> each SH row stored directly (no concat)
        x = in_ref[0].astype(jnp.float32)
        y = in_ref[1].astype(jnp.float32)
        z = in_ref[2].astype(jnp.float32)

        def store(i, v):
            out_ref[i] = v.astype(out_ref.dtype)

        _emit_sh_rows(x, y, z, degree, store)

    return kernel


def _round_up(v, m):
    return ((v + m - 1) // m) * m


def _default_tile_rows(out_dim, out_itemsize):
    """VMEM-budget-aware tile size (rows of 128 points), multiple of 8, <=1024."""
    try:
        kind = jax.devices()[0].device_kind.lower()
    except Exception:  # pragma: no cover - defensive
        kind = ""
    if "v5e" in kind or "v5 lite" in kind or "v5lite" in kind:
        budget = 12 * (1 << 20)   # stay under v5e's 16 MiB scoped-VMEM default
    else:
        budget = 24 * (1 << 20)   # stay under v6e/v7x's 32 MiB scoped-VMEM default
    # Double-buffered bytes per row of 128 points: f32 input (3 ch) + output.
    per_row = 2 * LANE * (3 * 4 + out_dim * out_itemsize)
    rows = budget // per_row
    return int(max(8, min(1024, (rows // 8) * 8)))


@functools.partial(
    jax.jit, static_argnames=("degree", "tile_rows", "out_dtype", "native_layout"))
def sh_encode(inputs, degree=4, tile_rows=None, out_dtype=None, native_layout=False):
    """Pallas SHEncoder forward.

    inputs: (..., 3).
    Returns (..., degree**2)  when native_layout=False (PyTorch layout), or
            (degree**2, ...)  when native_layout=True (kernel-native layout,
            skips the output transpose pass entirely).
    out_dtype: optional override (e.g. jnp.bfloat16) to halve output HBM traffic.
    """
    assert inputs.shape[-1] == 3
    assert 1 <= degree <= 5
    out_dim = degree ** 2
    out_dtype = jnp.dtype(out_dtype) if out_dtype is not None else inputs.dtype
    batch_shape = inputs.shape[:-1]

    flat = inputs.reshape(-1, 3)                       # (N, 3)
    n = flat.shape[0]
    rows = max(1, -(-n // LANE))                       # ceil(N / 128)

    if tile_rows is None:
        tile_rows = _default_tile_rows(out_dim, jnp.dtype(out_dtype).itemsize)
    assert tile_rows > 0 and tile_rows % 8 == 0

    # Tile rows per grid step. Keep the grid length >= 2 whenever there is
    # enough work so v7x's two TensorCores both get a "parallel" grid step
    # (extra step costs ~0.35us on single-TC chips, i.e. noise).
    rpt = tile_rows
    if rows <= rpt:
        if rows >= 16:
            rpt = max(8, _round_up(-(-rows // 2), 8))
        else:
            rpt = max(8, _round_up(rows, 8))
    rows_pad = _round_up(rows, rpt)
    n_pad = rows_pad * LANE

    # Single relayout pass: transpose first, pad the trailing axis (fuses with
    # the transpose in XLA), then a free reshape to (3, rows_pad, 128).
    xyz = flat.T                                       # (3, N)
    if n_pad != n:
        xyz = jnp.pad(xyz, ((0, 0), (0, n_pad - n)))
    xyz = xyz.reshape(3, rows_pad, LANE)

    grid = (rows_pad // rpt,)
    flops_per_pt = {1: 1, 2: 4, 3: 20, 4: 60, 5: 100}[degree]
    bytes_in = 3 * n_pad * xyz.dtype.itemsize
    bytes_out = out_dim * n_pad * out_dtype.itemsize

    out = pl.pallas_call(
        _make_sh_kernel(degree),
        out_shape=jax.ShapeDtypeStruct((out_dim, rows_pad, LANE), out_dtype),
        grid_spec=pltpu.PrefetchScalarGridSpec(
            num_scalar_prefetch=0,
            grid=grid,
            in_specs=[pl.BlockSpec((3, rpt, LANE), lambda i: (0, i, 0))],
            out_specs=pl.BlockSpec((out_dim, rpt, LANE), lambda i: (0, i, 0)),
        ),
        compiler_params=pltpu.CompilerParams(
            dimension_semantics=("parallel",)),
        cost_estimate=pl.CostEstimate(
            flops=flops_per_pt * n_pad, transcendentals=0,
            bytes_accessed=bytes_in + bytes_out),
    )(xyz)

    feat_major = out.reshape(out_dim, n_pad)[:, :n]    # (out_dim, N), lane-dense

    if native_layout:
        # No transpose-back pass: consumers (e.g. a following matmul) can use
        # this layout directly via dot_general dimension_numbers.
        return feat_major.reshape(out_dim, *batch_shape)

    # PyTorch-compatible layout (..., out_dim): costs one extra HBM pass.
    return feat_major.T.reshape(*batch_shape, out_dim)


def sh_encode_ref(inputs, degree=4):
    """Pure-JAX reference (mirrors the PyTorch forward), f32 math."""
    x = inputs[..., 0].astype(jnp.float32)
    y = inputs[..., 1].astype(jnp.float32)
    z = inputs[..., 2].astype(jnp.float32)
    rows = {}
    _emit_sh_rows(x, y, z, degree, lambda i, v: rows.__setitem__(i, v))
    stacked = jnp.stack([rows[i] for i in range(degree ** 2)], axis=-1)
    return stacked.astype(inputs.dtype)


if __name__ == "__main__":
    key = jax.random.PRNGKey(0)

    # Small batch of direction vectors, shape (2, 8, 3) -> output (2, 8, 16).
    dirs = jax.random.normal(key, (2, 8, 3), dtype=jnp.float32)
    dirs = dirs / jnp.linalg.norm(dirs, axis=-1, keepdims=True)

    out = jax.block_until_ready(sh_encode(dirs, degree=4))
    ref = sh_encode_ref(dirs, degree=4)
    assert out.shape == (2, 8, 16), out.shape
    assert jnp.allclose(out, ref, atol=1e-5, rtol=1e-5), "mismatch vs reference (deg=4)"

    # Kernel-native (out_dim, ...) layout path (skips the output transpose pass).
    out_native = jax.block_until_ready(sh_encode(dirs, degree=4, native_layout=True))
    assert out_native.shape == (16, 2, 8), out_native.shape
    assert jnp.allclose(out_native, jnp.moveaxis(ref, -1, 0), atol=1e-5, rtol=1e-5), \
        "mismatch vs reference (native layout)"

    # Multi-tile / padded path + non-16 out_dim (degree=3).
    key2 = jax.random.PRNGKey(1)
    dirs2 = jax.random.normal(key2, (21000, 3), dtype=jnp.float32)
    dirs2 = dirs2 / jnp.linalg.norm(dirs2, axis=-1, keepdims=True)
    out2 = jax.block_until_ready(sh_encode(dirs2, degree=3))
    ref2 = sh_encode_ref(dirs2, degree=3)
    assert out2.shape == (21000, 9), out2.shape
    assert jnp.allclose(out2, ref2, atol=1e-5, rtol=1e-5), "mismatch vs reference (deg=3)"

    print("KERNEL_OK")
</pallas_src>

<mosaic_0001>
module attributes {stable_mosaic.version = 11 : i64} {
  func.func @kernel(%arg0: i32, %arg1: memref<3x8x128xf32, #tpu.memory_space<vmem>>, %arg2: memref<16x8x128xf32, #tpu.memory_space<vmem>>) attributes {dimension_semantics = [#tpu.dimension_semantics<parallel>], iteration_bounds = array<i64: 1>, scalar_prefetch = 0 : i64, scratch_operands = 0 : i64, tpu.core_type = #tpu.core_type<tc>, window_params = [{transform_indices = @transform_0, window_bounds = array<i64: 3, 8, 128>}, {transform_indices = @transform_1, window_bounds = array<i64: 16, 8, 128>}]} {
    %c0 = arith.constant 0 : index
    %c0_0 = arith.constant 0 : index
    %c0_1 = arith.constant 0 : index
    %0 = vector.load %arg1[%c0, %c0_0, %c0_1] : memref<3x8x128xf32, #tpu.memory_space<vmem>>, vector<1x8x128xf32>
    %1 = vector.shape_cast %0 : vector<1x8x128xf32> to vector<8x128xf32>
    %c1 = arith.constant 1 : index
    %c0_2 = arith.constant 0 : index
    %c0_3 = arith.constant 0 : index
    %2 = vector.load %arg1[%c1, %c0_2, %c0_3] : memref<3x8x128xf32, #tpu.memory_space<vmem>>, vector<1x8x128xf32>
    %3 = vector.shape_cast %2 : vector<1x8x128xf32> to vector<8x128xf32>
    %c2 = arith.constant 2 : index
    %c0_4 = arith.constant 0 : index
    %c0_5 = arith.constant 0 : index
    %4 = vector.load %arg1[%c2, %c0_4, %c0_5] : memref<3x8x128xf32, #tpu.memory_space<vmem>>, vector<1x8x128xf32>
    %5 = vector.shape_cast %4 : vector<1x8x128xf32> to vector<8x128xf32>
    %cst = arith.constant 0.282094806 : f32
    %6 = vector.broadcast %cst : f32 to vector<8x128xf32>
    %c0_6 = arith.constant 0 : index
    %c0_7 = arith.constant 0 : index
    %c0_8 = arith.constant 0 : index
    %7 = vector.load %arg2[%c0_6, %c0_7, %c0_8] : memref<16x8x128xf32, #tpu.memory_space<vmem>>, vector<1x8x128xf32>
    %8 = vector.shape_cast %7 : vector<1x8x128xf32> to vector<8x128xf32>
    %9 = vector.shape_cast %6 : vector<8x128xf32> to vector<1x8x128xf32>
    tpu.vector_store %arg2[%c0_6, %c0_7, %c0_8], %9 {strides = array<i32>} : memref<16x8x128xf32, #tpu.memory_space<vmem>>, vector<1x8x128xf32>,
    %cst_9 = arith.constant -0.488602519 : f32
    %10 = vector.broadcast %cst_9 : f32 to vector<8x128xf32>
    %11 = arith.mulf %10, %3 : vector<8x128xf32>
    %c1_10 = arith.constant 1 : index
    %c0_11 = arith.constant 0 : index
    %c0_12 = arith.constant 0 : index
    %12 = vector.load %arg2[%c1_10, %c0_11, %c0_12] : memref<16x8x128xf32, #tpu.memory_space<vmem>>, vector<1x8x128xf32>
    %13 = vector.shape_cast %12 : vector<1x8x128xf32> to vector<8x128xf32>
    %14 = vector.shape_cast %11 : vector<8x128xf32> to vector<1x8x128xf32>
    tpu.vector_store %arg2[%c1_10, %c0_11, %c0_12], %14 {strides = array<i32>} : memref<16x8x128xf32, #tpu.memory_space<vmem>>, vector<1x8x128xf32>,
    %cst_13 = arith.constant 0.488602519 : f32
    %15 = vector.broadcast %cst_13 : f32 to vector<8x128xf32>
    %16 = arith.mulf %15, %5 : vector<8x128xf32>
    %c2_14 = arith.constant 2 : index
    %c0_15 = arith.constant 0 : index
    %c0_16 = arith.constant 0 : index
    %17 = vector.load %arg2[%c2_14, %c0_15, %c0_16] : memref<16x8x128xf32, #tpu.memory_space<vmem>>, vector<1x8x128xf32>
    %18 = vector.shape_cast %17 : vector<1x8x128xf32> to vector<8x128xf32>
    %19 = vector.shape_cast %16 : vector<8x128xf32> to vector<1x8x128xf32>
    tpu.vector_store %arg2[%c2_14, %c0_15, %c0_16], %19 {strides = array<i32>} : memref<16x8x128xf32, #tpu.memory_space<vmem>>, vector<1x8x128xf32>,
    %cst_17 = arith.constant -0.488602519 : f32
    %20 = vector.broadcast %cst_17 : f32 to vector<8x128xf32>
    %21 = arith.mulf %20, %1 : vector<8x128xf32>
    %c3 = arith.constant 3 : index
    %c0_18 = arith.constant 0 : index
    %c0_19 = arith.constant 0 : index
    %22 = vector.load %arg2[%c3, %c0_18, %c0_19] : memref<16x8x128xf32, #tpu.memory_space<vmem>>, vector<1x8x128xf32>
    %23 = vector.shape_cast %22 : vector<1x8x128xf32> to vector<8x128xf32>
    %24 = vector.shape_cast %21 : vector<8x128xf32> to vector<1x8x128xf32>
    tpu.vector_store %arg2[%c3, %c0_18, %c0_19], %24 {strides = array<i32>} : memref<16x8x128xf32, #tpu.memory_space<vmem>>, vector<1x8x128xf32>,
    %25 = arith.mulf %1, %1 : vector<8x128xf32>
    %26 = arith.mulf %3, %3 : vector<8x128xf32>
    %27 = arith.mulf %5, %5 : vector<8x128xf32>
    %28 = arith.mulf %1, %3 : vector<8x128xf32>
    %29 = arith.mulf %3, %5 : vector<8x128xf32>
    %30 = arith.mulf %1, %5 : vector<8x128xf32>
    %cst_20 = arith.constant 1.09254849 : f32
    %31 = vector.broadcast %cst_20 : f32 to vector<8x128xf32>
    %32 = arith.mulf %31, %28 : vector<8x128xf32>
    %c4 = arith.constant 4 : index
    %c0_21 = arith.constant 0 : index
    %c0_22 = arith.constant 0 : index
    %33 = vector.load %arg2[%c4, %c0_21, %c0_22] : memref<16x8x128xf32, #tpu.memory_space<vmem>>, vector<1x8x128xf32>
    %34 = vector.shape_cast %33 : vector<1x8x128xf32> to vector<8x128xf32>
    %35 = vector.shape_cast %32 : vector<8x128xf32> to vector<1x8x128xf32>
    tpu.vector_store %arg2[%c4, %c0_21, %c0_22], %35 {strides = array<i32>} : memref<16x8x128xf32, #tpu.memory_space<vmem>>, vector<1x8x128xf32>,
    %cst_23 = arith.constant -1.09254849 : f32
    %36 = vector.broadcast %cst_23 : f32 to vector<8x128xf32>
    %37 = arith.mulf %36, %29 : vector<8x128xf32>
    %c5 = arith.constant 5 : index
    %c0_24 = arith.constant 0 : index
    %c0_25 = arith.constant 0 : index
    %38 = vector.load %arg2[%c5, %c0_24, %c0_25] : memref<16x8x128xf32, #tpu.memory_space<vmem>>, vector<1x8x128xf32>
    %39 = vector.shape_cast %38 : vector<1x8x128xf32> to vector<8x128xf32>
    %40 = vector.shape_cast %37 : vector<8x128xf32> to vector<1x8x128xf32>
    tpu.vector_store %arg2[%c5, %c0_24, %c0_25], %40 {strides = array<i32>} : memref<16x8x128xf32, #tpu.memory_space<vmem>>, vector<1x8x128xf32>,
    %cst_26 = arith.constant 2.000000e+00 : f32
    %41 = vector.broadcast %cst_26 : f32 to vector<8x128xf32>
    %42 = arith.mulf %41, %27 : vector<8x128xf32>
    %43 = arith.subf %42, %25 : vector<8x128xf32>
    %44 = arith.subf %43, %26 : vector<8x128xf32>
    %cst_27 = arith.constant 0.31539157 : f32
    %45 = vector.broadcast %cst_27 : f32 to vector<8x128xf32>
    %46 = arith.mulf %45, %44 : vector<8x128xf32>
    %c6 = arith.constant 6 : index
    %c0_28 = arith.constant 0 : index
    %c0_29 = arith.constant 0 : index
    %47 = vector.load %arg2[%c6, %c0_28, %c0_29] : memref<16x8x128xf32, #tpu.memory_space<vmem>>, vector<1x8x128xf32>
    %48 = vector.shape_cast %47 : vector<1x8x128xf32> to vector<8x128xf32>
    %49 = vector.shape_cast %46 : vector<8x128xf32> to vector<1x8x128xf32>
    tpu.vector_store %arg2[%c6, %c0_28, %c0_29], %49 {strides = array<i32>} : memref<16x8x128xf32, #tpu.memory_space<vmem>>, vector<1x8x128xf32>,
    %cst_30 = arith.constant -1.09254849 : f32
    %50 = vector.broadcast %cst_30 : f32 to vector<8x128xf32>
    %51 = arith.mulf %50, %30 : vector<8x128xf32>
    %c7 = arith.constant 7 : index
    %c0_31 = arith.constant 0 : index
    %c0_32 = arith.constant 0 : index
    %52 = vector.load %arg2[%c7, %c0_31, %c0_32] : memref<16x8x128xf32, #tpu.memory_space<vmem>>, vector<1x8x128xf32>
    %53 = vector.shape_cast %52 : vector<1x8x128xf32> to vector<8x128xf32>
    %54 = vector.shape_cast %51 : vector<8x128xf32> to vector<1x8x128xf32>
    tpu.vector_store %arg2[%c7, %c0_31, %c0_32], %54 {strides = array<i32>} : memref<16x8x128xf32, #tpu.memory_space<vmem>>, vector<1x8x128xf32>,
    %55 = arith.subf %25, %26 : vector<8x128xf32>
    %cst_33 = arith.constant 0.546274245 : f32
    %56 = vector.broadcast %cst_33 : f32 to vector<8x128xf32>
    %57 = arith.mulf %56, %55 : vector<8x128xf32>
    %c8 = arith.constant 8 : index
    %c0_34 = arith.constant 0 : index
    %c0_35 = arith.constant 0 : index
    %58 = vector.load %arg2[%c8, %c0_34, %c0_35] : memref<16x8x128xf32, #tpu.memory_space<vmem>>, vector<1x8x128xf32>
    %59 = vector.shape_cast %58 : vector<1x8x128xf32> to vector<8x128xf32>
    %60 = vector.shape_cast %57 : vector<8x128xf32> to vector<1x8x128xf32>
    tpu.vector_store %arg2[%c8, %c0_34, %c0_35], %60 {strides = array<i32>} : memref<16x8x128xf32, #tpu.memory_space<vmem>>, vector<1x8x128xf32>,
    %cst_36 = arith.constant -0.590043604 : f32
    %61 = vector.broadcast %cst_36 : f32 to vector<8x128xf32>
    %62 = arith.mulf %61, %3 : vector<8x128xf32>
    %cst_37 = arith.constant 3.000000e+00 : f32
    %63 = vector.broadcast %cst_37 : f32 to vector<8x128xf32>
    %64 = arith.mulf %63, %25 : vector<8x128xf32>
    %65 = arith.subf %64, %26 : vector<8x128xf32>
    %66 = arith.mulf %62, %65 : vector<8x128xf32>
    %c9 = arith.constant 9 : index
    %c0_38 = arith.constant 0 : index
    %c0_39 = arith.constant 0 : index
    %67 = vector.load %arg2[%c9, %c0_38, %c0_39] : memref<16x8x128xf32, #tpu.memory_space<vmem>>, vector<1x8x128xf32>
    %68 = vector.shape_cast %67 : vector<1x8x128xf32> to vector<8x128xf32>
    %69 = vector.shape_cast %66 : vector<8x128xf32> to vector<1x8x128xf32>
    tpu.vector_store %arg2[%c9, %c0_38, %c0_39], %69 {strides = array<i32>} : memref<16x8x128xf32, #tpu.memory_space<vmem>>, vector<1x8x128xf32>,
    %cst_40 = arith.constant 2.89061141 : f32
    %70 = vector.broadcast %cst_40 : f32 to vector<8x128xf32>
    %71 = arith.mulf %70, %28 : vector<8x128xf32>
    %72 = arith.mulf %71, %5 : vector<8x128xf32>
    %c10 = arith.constant 10 : index
    %c0_41 = arith.constant 0 : index
    %c0_42 = arith.constant 0 : index
    %73 = vector.load %arg2[%c10, %c0_41, %c0_42] : memref<16x8x128xf32, #tpu.memory_space<vmem>>, vector<1x8x128xf32>
    %74 = vector.shape_cast %73 : vector<1x8x128xf32> to vector<8x128xf32>
    %75 = vector.shape_cast %72 : vector<8x128xf32> to vector<1x8x128xf32>
    tpu.vector_store %arg2[%c10, %c0_41, %c0_42], %75 {strides = array<i32>} : memref<16x8x128xf32, #tpu.memory_space<vmem>>, vector<1x8x128xf32>,
    %cst_43 = arith.constant -0.457045794 : f32
    %76 = vector.broadcast %cst_43 : f32 to vector<8x128xf32>
    %77 = arith.mulf %76, %3 : vector<8x128xf32>
    %cst_44 = arith.constant 4.000000e+00 : f32
    %78 = vector.broadcast %cst_44 : f32 to vector<8x128xf32>
    %79 = arith.mulf %78, %27 : vector<8x128xf32>
    %80 = arith.subf %79, %25 : vector<8x128xf32>
    %81 = arith.subf %80, %26 : vector<8x128xf32>
    %82 = arith.mulf %77, %81 : vector<8x128xf32>
    %c11 = arith.constant 11 : index
    %c0_45 = arith.constant 0 : index
    %c0_46 = arith.constant 0 : index
    %83 = vector.load %arg2[%c11, %c0_45, %c0_46] : memref<16x8x128xf32, #tpu.memory_space<vmem>>, vector<1x8x128xf32>
    %84 = vector.shape_cast %83 : vector<1x8x128xf32> to vector<8x128xf32>
    %85 = vector.shape_cast %82 : vector<8x128xf32> to vector<1x8x128xf32>
    tpu.vector_store %arg2[%c11, %c0_45, %c0_46], %85 {strides = array<i32>} : memref<16x8x128xf32, #tpu.memory_space<vmem>>, vector<1x8x128xf32>,
    %cst_47 = arith.constant 0.373176336 : f32
    %86 = vector.broadcast %cst_47 : f32 to vector<8x128xf32>
    %87 = arith.mulf %86, %5 : vector<8x128xf32>
    %cst_48 = arith.constant 2.000000e+00 : f32
    %88 = vector.broadcast %cst_48 : f32 to vector<8x128xf32>
    %89 = arith.mulf %88, %27 : vector<8x128xf32>
    %cst_49 = arith.constant 3.000000e+00 : f32
    %90 = vector.broadcast %cst_49 : f32 to vector<8x128xf32>
    %91 = arith.mulf %90, %25 : vector<8x128xf32>
    %92 = arith.subf %89, %91 : vector<8x128xf32>
    %cst_50 = arith.constant 3.000000e+00 : f32
    %93 = vector.broadcast %cst_50 : f32 to vector<8x128xf32>
    %94 = arith.mulf %93, %26 : vector<8x128xf32>
    %95 = arith.subf %92, %94 : vector<8x128xf32>
    %96 = arith.mulf %87, %95 : vector<8x128xf32>
    %c12 = arith.constant 12 : index
    %c0_51 = arith.constant 0 : index
    %c0_52 = arith.constant 0 : index
    %97 = vector.load %arg2[%c12, %c0_51, %c0_52] : memref<16x8x128xf32, #tpu.memory_space<vmem>>, vector<1x8x128xf32>
    %98 = vector.shape_cast %97 : vector<1x8x128xf32> to vector<8x128xf32>
    %99 = vector.shape_cast %96 : vector<8x128xf32> to vector<1x8x128xf32>
    tpu.vector_store %arg2[%c12, %c0_51, %c0_52], %99 {strides = array<i32>} : memref<16x8x128xf32, #tpu.memory_space<vmem>>, vector<1x8x128xf32>,
    %cst_53 = arith.constant -0.457045794 : f32
    %100 = vector.broadcast %cst_53 : f32 to vector<8x128xf32>
    %101 = arith.mulf %100, %1 : vector<8x128xf32>
    %cst_54 = arith.constant 4.000000e+00 : f32
    %102 = vector.broadcast %cst_54 : f32 to vector<8x128xf32>
    %103 = arith.mulf %102, %27 : vector<8x128xf32>
    %104 = arith.subf %103, %25 : vector<8x128xf32>
    %105 = arith.subf %104, %26 : vector<8x128xf32>
    %106 = arith.mulf %101, %105 : vector<8x128xf32>
    %c13 = arith.constant 13 : index
    %c0_55 = arith.constant 0 : index
    %c0_56 = arith.constant 0 : index
    %107 = vector.load %arg2[%c13, %c0_55, %c0_56] : memref<16x8x128xf32, #tpu.memory_space<vmem>>, vector<1x8x128xf32>
    %108 = vector.shape_cast %107 : vector<1x8x128xf32> to vector<8x128xf32>
    %109 = vector.shape_cast %106 : vector<8x128xf32> to vector<1x8x128xf32>
    tpu.vector_store %arg2[%c13, %c0_55, %c0_56], %109 {strides = array<i32>} : memref<16x8x128xf32, #tpu.memory_space<vmem>>, vector<1x8x128xf32>,
    %cst_57 = arith.constant 1.44530571 : f32
    %110 = vector.broadcast %cst_57 : f32 to vector<8x128xf32>
    %111 = arith.mulf %110, %5 : vector<8x128xf32>
    %112 = arith.subf %25, %26 : vector<8x128xf32>
    %113 = arith.mulf %111, %112 : vector<8x128xf32>
    %c14 = arith.constant 14 : index
    %c0_58 = arith.constant 0 : index
    %c0_59 = arith.constant 0 : index
    %114 = vector.load %arg2[%c14, %c0_58, %c0_59] : memref<16x8x128xf32, #tpu.memory_space<vmem>>, vector<1x8x128xf32>
    %115 = vector.shape_cast %114 : vector<1x8x128xf32> to vector<8x128xf32>
    %116 = vector.shape_cast %113 : vector<8x128xf32> to vector<1x8x128xf32>
    tpu.vector_store %arg2[%c14, %c0_58, %c0_59], %116 {strides = array<i32>} : memref<16x8x128xf32, #tpu.memory_space<vmem>>, vector<1x8x128xf32>,
    %cst_60 = arith.constant -0.590043604 : f32
    %117 = vector.broadcast %cst_60 : f32 to vector<8x128xf32>
    %118 = arith.mulf %117, %1 : vector<8x128xf32>
    %cst_61 = arith.constant 3.000000e+00 : f32
    %119 = vector.broadcast %cst_61 : f32 to vector<8x128xf32>
    %120 = arith.mulf %119, %26 : vector<8x128xf32>
    %121 = arith.subf %25, %120 : vector<8x128xf32>
    %122 = arith.mulf %118, %121 : vector<8x128xf32>
    %c15 = arith.constant 15 : index
    %c0_62 = arith.constant 0 : index
    %c0_63 = arith.constant 0 : index
    %123 = vector.load %arg2[%c15, %c0_62, %c0_63] : memref<16x8x128xf32, #tpu.memory_space<vmem>>, vector<1x8x128xf32>
    %124 = vector.shape_cast %123 : vector<1x8x128xf32> to vector<8x128xf32>
    %125 = vector.shape_cast %122 : vector<8x128xf32> to vector<1x8x128xf32>
    tpu.vector_store %arg2[%c15, %c0_62, %c0_63], %125 {strides = array<i32>} : memref<16x8x128xf32, #tpu.memory_space<vmem>>, vector<1x8x128xf32>,
    return
  }
  func.func @transform_0(%arg0: i32) -> (i32, i32, i32) {
    %c0_i32 = arith.constant 0 : i32
    %c0_i32_0 = arith.constant 0 : i32
    %c0_i32_1 = arith.constant 0 : i32
    return %c0_i32, %arg0, %c0_i32_0 : i32, i32, i32
  }
  func.func @transform_1(%arg0: i32) -> (i32, i32, i32) {
    %c0_i32 = arith.constant 0 : i32
    %c0_i32_0 = arith.constant 0 : i32
    %c0_i32_1 = arith.constant 0 : i32
    return %c0_i32, %arg0, %c0_i32_0 : i32, i32, i32
  }
}

</mosaic_0001>

<llo_original>
// kernel: sh_encode.1
$region0: #{sh_encode.1}
  #allocation0 [shape = 'u32[]', space=smem, size = 0x4, offset = 0x4, fixed_abs, tag = 'smem constant byte address 0x4 - core index']
  #allocation1 [shape = 'u32[72,128]{1,0:T(1,128)}', space=vmem, size = 0x9000, scoped, tag = 'internal scratch']
  %s0 = inlined_call_operand.vmem [shape: f32[3,8,128], index: 0, kind: input, shape index: {}]
  %s1 = inlined_call_operand.vmem [shape: f32[16,8,128], index: 1, kind: output, shape index: {}]
  %s2 = sld [smem:[#allocation0]]
  $region14: #{sh_encode.1} parent=0
    _
  %s4 = ssub.s32 1, %s2
  %s5 = scalar_select 0, %s4, %s2
  // Predicated region
  $region2: #{sh_encode.1} parent=0 // pred_check
    _
  $region3: #{sh_encode.1} parent=0 // pred_check_branch
    %7 = sbr.rel (0) target = $region5
  $region4: #{sh_encode.1} parent=0 // pred_region
    _
  $region5: #{sh_encode.1} parent=0 // pred_fallthru
    _
  %v8 = vld [vmem:[%s0] sm:$0xff]
  %s9 = scalar_lea.vmem %s0, 8
  %v10 = vld [vmem:[%s9] sm:$0xff]
  %s11 = scalar_lea.vmem %s0, 16
  %v12 = vld [vmem:[%s11] sm:$0xff]
  %13 = vst [vmem:[%s1] sm:$0xff] 0.2820948
  %v14 = vmul.f32 %v10, -0.48860252
  %s15 = scalar_lea.vmem %s1, 8
  %16 = vst [vmem:[%s15] sm:$0xff] %v14
  %v17 = vmul.f32 %v12, 0.48860252
  %s18 = scalar_lea.vmem %s1, 16
  %19 = vst [vmem:[%s18] sm:$0xff] %v17
  %v20 = vmul.f32 %v8, -0.48860252
  %s21 = scalar_lea.vmem %s1, 24
  %22 = vst [vmem:[%s21] sm:$0xff] %v20
  %v23 = vmul.f32 %v8, %v8
  %v24 = vmul.f32 %v10, %v10
  %v25 = vmul.f32 %v12, %v12
  %v26 = vmul.f32 %v8, %v10
  %v27 = vmul.f32 %v10, %v12
  %v28 = vmul.f32 %v8, %v12
  %v29 = vmul.f32 %v26, 1.0925485
  %s30 = scalar_lea.vmem %s1, 32
  %31 = vst [vmem:[%s30] sm:$0xff] %v29
  %v32 = vmul.f32 %v27, -1.0925485
  %s33 = scalar_lea.vmem %s1, 40
  %34 = vst [vmem:[%s33] sm:$0xff] %v32
  %v35 = vmul.f32 %v25, 2.0
  %v36 = vsub.f32 %v35, %v23
  %v37 = vsub.f32 %v36, %v24
  %v38 = vmul.f32 %v37, 0.31539157
  %s39 = scalar_lea.vmem %s1, 48
  %40 = vst [vmem:[%s39] sm:$0xff] %v38
  %v41 = vmul.f32 %v28, -1.0925485
  %s42 = scalar_lea.vmem %s1, 56
  %43 = vst [vmem:[%s42] sm:$0xff] %v41
  %v44 = vsub.f32 %v23, %v24
  %v45 = vmul.f32 %v44, 0.54627424
  %s46 = scalar_lea.vmem %s1, 64
  %47 = vst [vmem:[%s46] sm:$0xff] %v45
  %v48 = vmul.f32 %v10, -0.5900436
  %v49 = vmul.f32 %v23, 3.0
  %v50 = vsub.f32 %v49, %v24
  %v51 = vmul.f32 %v48, %v50
  %s52 = scalar_lea.vmem %s1, 72
  %53 = vst [vmem:[%s52] sm:$0xff] %v51
  %v54 = vmul.f32 %v26, 2.8906114
  %v55 = vmul.f32 %v54, %v12
  %s56 = scalar_lea.vmem %s1, 80
  %57 = vst [vmem:[%s56] sm:$0xff] %v55
  %v58 = vmul.f32 %v10, -0.4570458
  %v59 = vmul.f32 %v25, 4.0
  %v60 = vsub.f32 %v59, %v23
  %v61 = vsub.f32 %v60, %v24
  %v62 = vmul.f32 %v58, %v61
  %s63 = scalar_lea.vmem %s1, 88
  %64 = vst [vmem:[%s63] sm:$0xff] %v62
  %v65 = vmul.f32 %v12, 0.37317634
  %v66 = vsub.f32 %v35, %v49
  %v67 = vmul.f32 %v24, 3.0
  %v68 = vsub.f32 %v66, %v67
  %v69 = vmul.f32 %v65, %v68
  %s70 = scalar_lea.vmem %s1, 96
  %71 = vst [vmem:[%s70] sm:$0xff] %v69
  %v72 = vmul.f32 %v8, -0.4570458
  %v73 = vmul.f32 %v72, %v61
  %s74 = scalar_lea.vmem %s1, 104
  %75 = vst [vmem:[%s74] sm:$0xff] %v73
  %v76 = vmul.f32 %v12, 1.4453057
  %v77 = vmul.f32 %v76, %v44
  %s78 = scalar_lea.vmem %s1, 112
  %79 = vst [vmem:[%s78] sm:$0xff] %v77
  %v80 = vmul.f32 %v8, -0.5900436
  %v81 = vsub.f32 %v23, %v67
  %v82 = vmul.f32 %v80, %v81
  %s83 = scalar_lea.vmem %s1, 120
  %84 = vst [vmem:[%s83] sm:$0xff] %v82
  // Predicated region
  $region6: #{sh_encode.1} parent=0 // pred_check
    _
  $region7: #{sh_encode.1} parent=0 // pred_check_branch
    %86 = sbr.rel (0) target = $region9
  $region8: #{sh_encode.1} parent=0 // pred_region
    _
  $region9: #{sh_encode.1} parent=0 // pred_fallthru
    _
  // Predicated region
  $region10: #{sh_encode.1} parent=0 // pred_check
    _
  $region11: #{sh_encode.1} parent=0 // pred_check_branch
    %88 = sbr.rel (0) target = $region13
  $region12: #{sh_encode.1} parent=0 // pred_region
    _
  $region13: #{sh_encode.1} parent=0 // pred_fallthru
    _

</llo_original>
